<compile_context>
chip_gen: v7x
topology: tpu7x:2x2x1
jax: 0.10.0
libtpu: 0.0.40
codegen_flags: <defaults>
</compile_context>

<pallas_src>
from math import sqrt

import jax
import jax.numpy as jnp
from jax.experimental import pallas as pl
from jax.experimental.pallas import tpu as pltpu


def _round_up(x, m):
    return (x + m - 1) // m * m


def _dnn_kernel(cand_ref, user_ref, w1a_ref, w1b_ref, b1_ref, w2_ref, b2_ref, o_ref):
    # cand_ref/user_ref: (TB, D)   w1a_ref/w1b_ref: (D, H)
    # b1_ref: (1, H)   w2_ref: (1, H)   b2_ref: (1, 1) in SMEM   o_ref: (1, TB)
    h = jnp.dot(cand_ref[...], w1a_ref[...], preferred_element_type=jnp.float32)
    h = h + jnp.dot(user_ref[...], w1b_ref[...], preferred_element_type=jnp.float32)
    h = jnp.maximum(h + b1_ref[...], 0.0)                      # (TB, H), ReLU
    # Second Linear (H -> 1) on the VPU (mul) + XLU (lane reduce); keeps the MXU
    # free and produces a lane-dense (1, TB) output row instead of a (TB, 1)
    # masked column store.
    y = jnp.sum(h * w2_ref[...], axis=-1) + b2_ref[0, 0]       # (TB,)
    o_ref[...] = y[None, :]                                    # (1, TB)


def dnn_click_predictor(candidate_news_vector, user_vector, w1, b1, w2, b2,
                        *, block_b=1024):
    """Pallas implementation of DNNClickPredictor.forward.

    Args:
      candidate_news_vector: (B, D) float32
      user_vector:           (B, D) float32
      w1: (2*D, H)  (transposed vs nn.Linear's (H, 2*D))
      b1: (H,), w2: (H, 1), b2: (1,)
    Returns:
      (B,) float32 click scores.
    """
    assert candidate_news_vector.ndim == 2 and user_vector.ndim == 2
    assert candidate_news_vector.shape == user_vector.shape

    cand = candidate_news_vector.astype(jnp.float32)
    user = user_vector.astype(jnp.float32)
    B, D = cand.shape
    H = w1.shape[1]
    assert w1.shape == (2 * D, H)

    # Split W1 so the concat is fused into the kernel (x@W1 == cand@W1a + user@W1b).
    w1a = w1[:D].astype(jnp.float32)                    # (D, H)
    w1b = w1[D:].astype(jnp.float32)                    # (D, H)
    b1_2d = b1.reshape(1, H).astype(jnp.float32)        # (1, H)
    w2_row = w2.reshape(1, H).astype(jnp.float32)       # (1, H)
    b2_2d = b2.reshape(1, 1).astype(jnp.float32)        # (1, 1) -> SMEM scalar

    # Batch tiling (TB multiple of 8; 1024 -> multiple of 128 for big batches).
    TB = int(min(block_b, _round_up(B, 8)))
    Bp = _round_up(B, TB)
    if Bp != B:
        pad = Bp - B
        cand = jnp.pad(cand, ((0, pad), (0, 0)))
        user = jnp.pad(user, ((0, pad), (0, 0)))
    num_tiles = Bp // TB

    # Advisory cost estimate for the XLA scheduler.
    flops = 2 * Bp * (2 * D) * H + 3 * Bp * H
    bytes_accessed = 4 * (2 * Bp * D + Bp + 2 * D * H + 2 * H + 1)
    cost = pl.CostEstimate(flops=flops, transcendentals=0,
                           bytes_accessed=bytes_accessed)

    # VMEM budget: double-buffered activation tiles + output rows + weights,
    # with headroom; capped below v7x's 64 MiB physical VMEM.
    act_bytes = 2 * (2 * TB * D * 4)          # cand + user tiles, x2 buffers
    out_bytes = 2 * (TB * 4)                  # output row, x2 buffers
    w_bytes = 2 * 4 * (2 * D * H + 2 * H + 1)
    vmem_limit = int(min(64 * 1024 * 1024,
                         max(16 * 1024 * 1024,
                             2 * (act_bytes + out_bytes + w_bytes))))

    out = pl.pallas_call(
        _dnn_kernel,
        out_shape=jax.ShapeDtypeStruct((num_tiles, TB), jnp.float32),
        grid=(num_tiles,),
        in_specs=[
            pl.BlockSpec((TB, D), lambda i: (i, 0)),          # cand tile
            pl.BlockSpec((TB, D), lambda i: (i, 0)),          # user tile
            pl.BlockSpec((D, H), lambda i: (0, 0)),           # W1a (resident)
            pl.BlockSpec((D, H), lambda i: (0, 0)),           # W1b (resident)
            pl.BlockSpec((1, H), lambda i: (0, 0)),           # b1  (resident)
            pl.BlockSpec((1, H), lambda i: (0, 0)),           # W2 row (resident)
            pl.BlockSpec((1, 1), lambda i: (0, 0),
                         memory_space=pltpu.MemorySpace.SMEM),  # b2 scalar
        ],
        out_specs=pl.BlockSpec((1, TB), lambda i: (i, 0)),      # lane-dense slab
        compiler_params=pltpu.CompilerParams(
            dimension_semantics=("parallel",),
            vmem_limit_bytes=vmem_limit),
        cost_estimate=cost,
    )(cand, user, w1a, w1b, b1_2d, w2_row, b2_2d)

    # (num_tiles, TB) -> (Bp,) row-major preserves batch order; drop padding.
    return out.reshape(-1)[:B]


if __name__ == "__main__":
    # Small shapes consistent with the module: embedding_dim=32 -> input_size=64,
    # hidden_size = int(sqrt(64)) = 8, batch=8.
    B = 8
    embedding_dim = 32
    input_size = 2 * embedding_dim
    hidden_size = int(sqrt(input_size))

    key = jax.random.PRNGKey(0)
    k_cand, k_user, k_w1, k_w2 = jax.random.split(key, 4)

    candidate = jax.random.normal(k_cand, (B, embedding_dim), dtype=jnp.float32)
    user = jax.random.normal(k_user, (B, embedding_dim), dtype=jnp.float32)

    # Deterministic parameter init (mimics xavier_uniform + bias 0.01, init_weight=True).
    def xavier_uniform(k, fan_in, fan_out):
        limit = sqrt(6.0 / (fan_in + fan_out))
        # stored as (in, out): transpose of PyTorch's (out, in) weight
        return jax.random.uniform(k, (fan_in, fan_out), jnp.float32, -limit, limit)

    w1 = xavier_uniform(k_w1, input_size, hidden_size)           # (64, 8)
    b1 = jnp.full((hidden_size,), 0.01, dtype=jnp.float32)       # (8,)
    w2 = xavier_uniform(k_w2, hidden_size, 1)                    # (8, 1)
    b2 = jnp.full((1,), 0.01, dtype=jnp.float32)                 # (1,)

    out = dnn_click_predictor(candidate, user, w1, b1, w2, b2)
    out = jax.block_until_ready(out)

    # Pure-JAX reference check.
    x = jnp.concatenate([candidate, user], axis=1)
    ref = (jnp.maximum(x @ w1 + b1, 0.0) @ w2 + b2)[:, 0]
    assert out.shape == (B,)
    assert jnp.allclose(out, ref, atol=1e-5, rtol=1e-5)

    print("KERNEL_OK")
</pallas_src>

<mosaic_0001>
module attributes {stable_mosaic.version = 11 : i64} {
  func.func @_dnn_kernel(%arg0: i32, %arg1: memref<8x32xf32, #tpu.memory_space<vmem>>, %arg2: memref<8x32xf32, #tpu.memory_space<vmem>>, %arg3: memref<32x8xf32, #tpu.memory_space<vmem>>, %arg4: memref<32x8xf32, #tpu.memory_space<vmem>>, %arg5: memref<1x8xf32, #tpu.memory_space<vmem>>, %arg6: memref<1x8xf32, #tpu.memory_space<vmem>>, %arg7: memref<1x1xf32, #tpu.memory_space<smem>>, %arg8: memref<1x8xf32, #tpu.memory_space<vmem>>) attributes {dimension_semantics = [#tpu.dimension_semantics<parallel>], iteration_bounds = array<i64: 1>, scalar_prefetch = 0 : i64, scratch_operands = 0 : i64, tpu.core_type = #tpu.core_type<tc>, window_params = [{transform_indices = @transform_0, window_bounds = array<i64: 8, 32>}, {transform_indices = @transform_1, window_bounds = array<i64: 8, 32>}, {pipeline_mode = #tpu.pipeline_mode<synchronous>, transform_indices = @transform_2, window_bounds = array<i64: 32, 8>}, {pipeline_mode = #tpu.pipeline_mode<synchronous>, transform_indices = @transform_3, window_bounds = array<i64: 32, 8>}, {pipeline_mode = #tpu.pipeline_mode<synchronous>, transform_indices = @transform_4, window_bounds = array<i64: 1, 8>}, {pipeline_mode = #tpu.pipeline_mode<synchronous>, transform_indices = @transform_5, window_bounds = array<i64: 1, 8>}, {transform_indices = @transform_6, window_bounds = array<i64: 1, 1>}, {transform_indices = @transform_7, window_bounds = array<i64: 1, 8>}]} {
    %c0 = arith.constant 0 : index
    %c0_0 = arith.constant 0 : index
    %0 = vector.load %arg1[%c0, %c0_0] : memref<8x32xf32, #tpu.memory_space<vmem>>, vector<8x32xf32>
    %c0_1 = arith.constant 0 : index
    %c0_2 = arith.constant 0 : index
    %1 = vector.load %arg3[%c0_1, %c0_2] : memref<32x8xf32, #tpu.memory_space<vmem>>, vector<32x8xf32>
    %cst = arith.constant dense<0.000000e+00> : vector<8x8xf32>
    %2 = tpu.matmul %0, %1, %cst {dimension_numbers = #tpu.dot_dimension_numbers<[1], [0], [0], [1], [0, 0, 1, 1], [], []>} : vector<8x32xf32>, vector<32x8xf32>, vector<8x8xf32> -> vector<8x8xf32>
    %c0_3 = arith.constant 0 : index
    %c0_4 = arith.constant 0 : index
    %3 = vector.load %arg2[%c0_3, %c0_4] : memref<8x32xf32, #tpu.memory_space<vmem>>, vector<8x32xf32>
    %c0_5 = arith.constant 0 : index
    %c0_6 = arith.constant 0 : index
    %4 = vector.load %arg4[%c0_5, %c0_6] : memref<32x8xf32, #tpu.memory_space<vmem>>, vector<32x8xf32>
    %cst_7 = arith.constant dense<0.000000e+00> : vector<8x8xf32>
    %5 = tpu.matmul %3, %4, %cst_7 {dimension_numbers = #tpu.dot_dimension_numbers<[1], [0], [0], [1], [0, 0, 1, 1], [], []>} : vector<8x32xf32>, vector<32x8xf32>, vector<8x8xf32> -> vector<8x8xf32>
    %6 = arith.addf %2, %5 : vector<8x8xf32>
    %c0_8 = arith.constant 0 : index
    %c0_9 = arith.constant 0 : index
    %7 = vector.load %arg5[%c0_8, %c0_9] : memref<1x8xf32, #tpu.memory_space<vmem>>, vector<1x8xf32>
    %8 = vector.broadcast %7 : vector<1x8xf32> to vector<8x8xf32>
    %9 = arith.addf %6, %8 : vector<8x8xf32>
    %cst_10 = arith.constant 0.000000e+00 : f32
    %10 = vector.broadcast %cst_10 : f32 to vector<8x8xf32>
    %11 = arith.maximumf %9, %10 : vector<8x8xf32>
    %c0_11 = arith.constant 0 : index
    %c0_12 = arith.constant 0 : index
    %12 = vector.load %arg6[%c0_11, %c0_12] : memref<1x8xf32, #tpu.memory_space<vmem>>, vector<1x8xf32>
    %13 = vector.broadcast %12 : vector<1x8xf32> to vector<8x8xf32>
    %14 = arith.mulf %11, %13 : vector<8x8xf32>
    %cst_13 = arith.constant dense<0.000000e+00> : vector<8xf32>
    %15 = vector.multi_reduction <add>, %14, %cst_13 [1] : vector<8x8xf32> to vector<8xf32>
    %c0_14 = arith.constant 0 : index
    %c0_15 = arith.constant 0 : index
    %16 = memref.load %arg7[%c0_14, %c0_15] : memref<1x1xf32, #tpu.memory_space<smem>>
    %17 = vector.broadcast %16 : f32 to vector<8xf32>
    %18 = arith.addf %15, %17 : vector<8xf32>
    %19 = vector.shape_cast %18 : vector<8xf32> to vector<1x8xf32>
    %c0_16 = arith.constant 0 : index
    %c0_17 = arith.constant 0 : index
    %20 = vector.load %arg8[%c0_16, %c0_17] : memref<1x8xf32, #tpu.memory_space<vmem>>, vector<1x8xf32>
    tpu.vector_store %arg8[%c0_16, %c0_17], %19 {strides = array<i32>} : memref<1x8xf32, #tpu.memory_space<vmem>>, vector<1x8xf32>,
    return
  }
  func.func @transform_0(%arg0: i32) -> (i32, i32) {
    %c0_i32 = arith.constant 0 : i32
    %c0_i32_0 = arith.constant 0 : i32
    return %arg0, %c0_i32 : i32, i32
  }
  func.func @transform_1(%arg0: i32) -> (i32, i32) {
    %c0_i32 = arith.constant 0 : i32
    %c0_i32_0 = arith.constant 0 : i32
    return %arg0, %c0_i32 : i32, i32
  }
  func.func @transform_2(%arg0: i32) -> (i32, i32) {
    %c0_i32 = arith.constant 0 : i32
    %c0_i32_0 = arith.constant 0 : i32
    %c0_i32_1 = arith.constant 0 : i32
    return %c0_i32, %c0_i32_0 : i32, i32
  }
  func.func @transform_3(%arg0: i32) -> (i32, i32) {
    %c0_i32 = arith.constant 0 : i32
    %c0_i32_0 = arith.constant 0 : i32
    %c0_i32_1 = arith.constant 0 : i32
    return %c0_i32, %c0_i32_0 : i32, i32
  }
  func.func @transform_4(%arg0: i32) -> (i32, i32) {
    %c0_i32 = arith.constant 0 : i32
    %c0_i32_0 = arith.constant 0 : i32
    %c0_i32_1 = arith.constant 0 : i32
    return %c0_i32, %c0_i32_0 : i32, i32
  }
  func.func @transform_5(%arg0: i32) -> (i32, i32) {
    %c0_i32 = arith.constant 0 : i32
    %c0_i32_0 = arith.constant 0 : i32
    %c0_i32_1 = arith.constant 0 : i32
    return %c0_i32, %c0_i32_0 : i32, i32
  }
  func.func @transform_6(%arg0: i32) -> (i32, i32) {
    %c0_i32 = arith.constant 0 : i32
    %c0_i32_0 = arith.constant 0 : i32
    %c0_i32_1 = arith.constant 0 : i32
    return %c0_i32, %c0_i32_0 : i32, i32
  }
  func.func @transform_7(%arg0: i32) -> (i32, i32) {
    %c0_i32 = arith.constant 0 : i32
    %c0_i32_0 = arith.constant 0 : i32
    return %arg0, %c0_i32 : i32, i32
  }
}

</mosaic_0001>

<llo_original>
// kernel: tpu_custom_call.1
$region0: #{tpu_custom_call.1}
  #allocation0 [shape = 'u32[]', space=smem, size = 0x4, offset = 0x4, fixed_abs, tag = 'smem constant byte address 0x4 - core index']
  #allocation1 [shape = 'u32[144,128]{1,0:T(1,128)}', space=vmem, size = 0x12000, scoped, tag = 'internal scratch']
  #allocation2 [shape = 'f32[1,1]{1,0:T(1,128)S(6)}', space=smem, size = 0x200, scoped, tag = 'scoped memory for tpu_custom_call.1']
  %s0 = inlined_call_operand.vmem [shape: f32[8,32], index: 0, kind: input, shape index: {}]
  %s1 = inlined_call_operand.vmem [shape: f32[8,32], index: 1, kind: input, shape index: {}]
  %s2 = inlined_call_operand.vmem [shape: f32[32,8], index: 2, kind: input, shape index: {}]
  %s3 = inlined_call_operand.vmem [shape: f32[32,8], index: 3, kind: input, shape index: {}]
  %s4 = inlined_call_operand.vmem [shape: f32[1,8], index: 4, kind: input, shape index: {}]
  %s5 = inlined_call_operand.vmem [shape: f32[1,8], index: 5, kind: input, shape index: {}]
  %s6 = inlined_call_operand.<no memory space> [shape: f32[1,1], index: 6, kind: input, shape index: {}]
  %s7 = inlined_call_operand.hbm [shape: f32[1,8], index: 7, kind: output, shape index: {}]
  %s8 = sld [smem:[#allocation0]]
  $region38: #{tpu_custom_call.1} parent=0
    _
  %s10 = ssub.s32 1, %s8
  %s11 = scalar_select 0, %s10, %s8
  %12 = sst [smem:[#allocation2]] %s6
  $region1: #{tpu_custom_call.1} parent=0
    #allocation3 [shape = 'u8[512]{0}', space=vmem, size = 0x400, scoped, tag = 'output window, operand 0, single buffered']
    #allocation4 [shape = 's32[1]{0}', space=sflag, size = 0x4, scoped, tag = 'scoped memory for tpu_custom_call.1']
    %13 = vsyncpa [#allocation4], 0
    // Predicated region
    $region2: #{tpu_custom_call.1} parent=1 // pred_check
      _
    $region3: #{tpu_custom_call.1} parent=1 // pred_check_branch
      %15 = sbr.rel (0) target = $region5
    $region4: #{tpu_custom_call.1} parent=1 // pred_region
      _
    $region5: #{tpu_custom_call.1} parent=1 // pred_fallthru
      _
    // Predicated region
    $region6: #{tpu_custom_call.1} parent=1 // pred_check
      _
    $region7: #{tpu_custom_call.1} parent=1 // pred_check_branch
      %17 = sbr.rel (0) target = $region9
    $region8: #{tpu_custom_call.1} parent=1 // pred_region
      _
    $region9: #{tpu_custom_call.1} parent=1 // pred_fallthru
      _
    // Predicated region
    $region10: #{tpu_custom_call.1} parent=1 // pred_check
      _
    $region11: #{tpu_custom_call.1} parent=1 // pred_check_branch
      %19 = sbr.rel (0) target = $region13
    $region12: #{tpu_custom_call.1} parent=1 // pred_region
      _
    $region13: #{tpu_custom_call.1} parent=1 // pred_fallthru
      _
    // Predicated region
    $region14: #{tpu_custom_call.1} parent=1 // pred_check
      _
    $region15: #{tpu_custom_call.1} parent=1 // pred_check_branch
      %21 = sbr.rel (0) target = $region17
    $region16: #{tpu_custom_call.1} parent=1 // pred_region
      _
    $region17: #{tpu_custom_call.1} parent=1 // pred_fallthru
      _
    // Predicated region
    $region18: #{tpu_custom_call.1} parent=1 // pred_check
      _
    $region19: #{tpu_custom_call.1} parent=1 // pred_check_branch
      %23 = sbr.rel (0) target = $region21
    $region20: #{tpu_custom_call.1} parent=1 // pred_region
      _
    $region21: #{tpu_custom_call.1} parent=1 // pred_fallthru
      _
    // Predicated region
    $region22: #{tpu_custom_call.1} parent=1 // pred_check
      _
    $region23: #{tpu_custom_call.1} parent=1 // pred_check_branch
      %25 = sbr.rel (0) target = $region25
    $region24: #{tpu_custom_call.1} parent=1 // pred_region
      _
    $region25: #{tpu_custom_call.1} parent=1 // pred_fallthru
      _
    // Predicated region
    $region26: #{tpu_custom_call.1} parent=1 // pred_check
      _
    $region27: #{tpu_custom_call.1} parent=1 // pred_check_branch
      %27 = sbr.rel (0) target = $region29
    $region28: #{tpu_custom_call.1} parent=1 // pred_region
      _
    $region29: #{tpu_custom_call.1} parent=1 // pred_fallthru
      _
    %v28 = vld [vmem:[%s0] sm:$0xff]
    %v29 = vld [vmem:[%s2] sm:$0xff]
    %v30 = vld [vmem:[%s2 + $0x8] sm:$0xff]
    %v31 = vld [vmem:[%s2 + $0x10] sm:$0xff]
    %v32 = vld [vmem:[%s2 + $0x18] sm:$0xff]
    %v33 = vld [vmem:[%s1] sm:$0xff]
    %v34 = vld [vmem:[%s3] sm:$0xff]
    %v35 = vld [vmem:[%s3 + $0x8] sm:$0xff]
    %v36 = vld [vmem:[%s3 + $0x10] sm:$0xff]
    %v37 = vld [vmem:[%s3 + $0x18] sm:$0xff]
    %vm38 = vcmask 261120
    %v40 = vsel %vm38, %v33, 0
    %42 = vmatprep.subr.mxu0 0.0
    %43 = vmatpush1.msra.mxu0 %v34
    %44 = vmatprep.subr.mxu0 0.0
    %45 = vmatpush1.msra.mxu0 %v35
    %46 = vmatprep.subr.mxu0 0.0
    %47 = vmatpush1.msra.mxu0 %v36
    %48 = vmatprep.subr.mxu0 0.0
    %49 = vmatpush1.msra.mxu0 %v37
    %50 = vmatprep.subr.mxu0 0.0
    %51 = vmatpush1.msra.mxu0 0.0
    %52 = vmatprep.subr.mxu0 0.0
    %53 = vmatpush1.msra.mxu0 0.0
    %54 = vmatprep.subr.mxu0 0.0
    %55 = vmatpush1.msra.mxu0 0.0
    %56 = vmatprep.subr.mxu0 0.0
    %57 = vmatpush1.msra.mxu0 0.0
    %58 = vmatprep.subr.mxu0 0.0
    %59 = vmatpush1.msra.mxu0 0.0
    %60 = vmatprep.subr.mxu0 0.0
    %61 = vmatpush1.msra.mxu0 0.0
    %62 = vmatprep.subr.mxu0 0.0
    %63 = vmatpush1.msra.mxu0 0.0
    %64 = vmatprep.subr.mxu0 0.0
    %65 = vmatpush1.msra.mxu0 0.0
    %66 = vmatprep.subr.mxu0 0.0
    %67 = vmatpush1.msra.mxu0 0.0
    %68 = vmatprep.subr.mxu0 0.0
    %69 = vmatpush1.msra.mxu0 0.0
    %70 = vmatprep.subr.mxu0 0.0
    %71 = vmatpush1.msra.mxu0 0.0
    %72 = vmatprep.subr.mxu0 0.0
    %73 = vmatpush1.msra.mxu0 0.0
    %74 = vmatprep.subr.mxu0 0.0
    %75 = vmatpush1.msra.mxu0 0.0
    %76 = vmatprep.subr.mxu0 0.0
    %77 = vmatpush1.msra.mxu0 0.0
    %78 = vmatprep.subr.mxu0 0.0
    %79 = vmatpush1.msra.mxu0 0.0
    %80 = vmatprep.subr.mxu0 0.0
    %81 = vmatpush1.msra.mxu0 0.0
    %82 = vmatprep.subr.mxu0 0.0
    %83 = vmatpush1.msra.mxu0 0.0
    %84 = vmatprep.subr.mxu0 0.0
    %85 = vmatpush1.msra.mxu0 0.0
    %86 = vmatprep.subr.mxu0 0.0
    %87 = vmatpush1.msra.mxu0 0.0
    %88 = vmatprep.subr.mxu0 0.0
    %89 = vmatpush1.msra.mxu0 0.0
    %90 = vmatprep.subr.mxu0 0.0
    %91 = vmatpush1.msra.mxu0 0.0
    %92 = vmatprep.subr.mxu0 0.0
    %93 = vmatpush1.msra.mxu0 0.0
    %94 = vmatprep.subr.mxu0 0.0
    %95 = vmatpush1.msra.mxu0 0.0
    %96 = vmatprep.subr.mxu0 0.0
    %97 = vmatpush1.msra.mxu0 0.0
    %98 = vmatprep.subr.mxu0 0.0
    %99 = vmatpush1.msra.mxu0 0.0
    %100 = vmatprep.subr.mxu0 0.0
    %101 = vmatpush1.msra.mxu0 0.0
    %102 = vmatprep.subr.mxu0 0.0
    %103 = vmatpush1.msra.mxu0 0.0
    %104 = vmatprep.subr.mxu0 0.0
    %105 = vmatpush1.msra.mxu0 0.0
    %106 = vmatprep.mubr.f32.mxu0 0.0
    %107 = vmatmul.mubr.f32.gmra.mrb[0].mxu0 %v40
    %v108 = vpop.f32.mrb[0].mxu0
    %v109 = vadd.f32 0.0, %v108
    %v110 = vpop.f32.mrb[0].mxu0
    %111 = vdwg.mxu0
    %v113 = vsel %vm38, %v28, 0
    %115 = vmatprep.subr.mxu0 0.0
    %116 = vmatpush1.msra.mxu0 %v29
    %117 = vmatprep.subr.mxu0 0.0
    %118 = vmatpush1.msra.mxu0 %v30
    %119 = vmatprep.subr.mxu0 0.0
    %120 = vmatpush1.msra.mxu0 %v31
    %121 = vmatprep.subr.mxu0 0.0
    %122 = vmatpush1.msra.mxu0 %v32
    %123 = vmatprep.subr.mxu0 0.0
    %124 = vmatpush1.msra.mxu0 0.0
    %125 = vmatprep.subr.mxu0 0.0
    %126 = vmatpush1.msra.mxu0 0.0
    %127 = vmatprep.subr.mxu0 0.0
    %128 = vmatpush1.msra.mxu0 0.0
    %129 = vmatprep.subr.mxu0 0.0
    %130 = vmatpush1.msra.mxu0 0.0
    %131 = vmatprep.subr.mxu0 0.0
    %132 = vmatpush1.msra.mxu0 0.0
    %133 = vmatprep.subr.mxu0 0.0
    %134 = vmatpush1.msra.mxu0 0.0
    %135 = vmatprep.subr.mxu0 0.0
    %136 = vmatpush1.msra.mxu0 0.0
    %137 = vmatprep.subr.mxu0 0.0
    %138 = vmatpush1.msra.mxu0 0.0
    %139 = vmatprep.subr.mxu0 0.0
    %140 = vmatpush1.msra.mxu0 0.0
    %141 = vmatprep.subr.mxu0 0.0
    %142 = vmatpush1.msra.mxu0 0.0
    %143 = vmatprep.subr.mxu0 0.0
    %144 = vmatpush1.msra.mxu0 0.0
    %145 = vmatprep.subr.mxu0 0.0
    %146 = vmatpush1.msra.mxu0 0.0
    %147 = vmatprep.subr.mxu0 0.0
    %148 = vmatpush1.msra.mxu0 0.0
    %149 = vmatprep.subr.mxu0 0.0
    %150 = vmatpush1.msra.mxu0 0.0
    %151 = vmatprep.subr.mxu0 0.0
    %152 = vmatpush1.msra.mxu0 0.0
    %153 = vmatprep.subr.mxu0 0.0
    %154 = vmatpush1.msra.mxu0 0.0
    %155 = vmatprep.subr.mxu0 0.0
    %156 = vmatpush1.msra.mxu0 0.0
    %157 = vmatprep.subr.mxu0 0.0
    %158 = vmatpush1.msra.mxu0 0.0
    %159 = vmatprep.subr.mxu0 0.0
    %160 = vmatpush1.msra.mxu0 0.0
    %161 = vmatprep.subr.mxu0 0.0
    %162 = vmatpush1.msra.mxu0 0.0
    %163 = vmatprep.subr.mxu0 0.0
    %164 = vmatpush1.msra.mxu0 0.0
    %165 = vmatprep.subr.mxu0 0.0
    %166 = vmatpush1.msra.mxu0 0.0
    %167 = vmatprep.subr.mxu0 0.0
    %168 = vmatpush1.msra.mxu0 0.0
    %169 = vmatprep.subr.mxu0 0.0
    %170 = vmatpush1.msra.mxu0 0.0
    %171 = vmatprep.subr.mxu0 0.0
    %172 = vmatpush1.msra.mxu0 0.0
    %173 = vmatprep.subr.mxu0 0.0
    %174 = vmatpush1.msra.mxu0 0.0
    %175 = vmatprep.subr.mxu0 0.0
    %176 = vmatpush1.msra.mxu0 0.0
    %177 = vmatprep.subr.mxu0 0.0
    %178 = vmatpush1.msra.mxu0 0.0
    %179 = vmatprep.mubr.f32.mxu0 0.0
    %180 = vmatmul.mubr.f32.gmra.mrb[0].mxu0 %v113
    %v181 = vpop.f32.mrb[0].mxu0
    %v182 = vadd.f32 %v109, %v181
    %v183 = vpop.f32.mrb[0].mxu0
    %184 = vdwg.mxu0
    %v185 = vld [vmem:[%s4] sm:$0x1]
    %v187 = vlaneseq
    %v188 = vshrl.u32 %v187, 7
    %v189 = vsub.s32 0, %v188
    %v190 = vrot.slane %v185, %v189
    %v192 = vadd.f32 %v182, %v190
    %v193 = vmax.f32 %v192, 0.0
    %v194 = vld [vmem:[%s5] sm:$0x1]
    %v196 = vlaneseq
    %v197 = vshrl.u32 %v196, 7
    %v198 = vsub.s32 0, %v197
    %v199 = vrot.slane %v194, %v198
    %v201 = vmul.f32 %v193, %v199
    %vm202 = vcmask 64512
    %v203 = vsel %vm202, %v201, 0.0
    %204 = vadd.xlane.f32.xlu0 %v203
    %v205 = vpop.xlane.xlu0 %204
    %s206 = sld [smem:[#allocation2]]
    %v207 = vstv %s206
    %v208 = vadd.f32 %v205, %v207
    %v210 = vlaneseq
    %v211 = vand.u32 %v210, 127
    %v212 = vlaneseq
    %v213 = vshrl.u32 %v212, 7
    %v214 = vsub.s32 %v211, %v213
    %v215 = vrot.slane %v208, %v214
    %vm217 = vcmask 57344
    %218 = vst.msk [vmem:[#allocation3] sm:$0x1] %vm217, %v215
    // Predicated region
    $region30: #{tpu_custom_call.1} parent=1 // pred_check
      _
    $region31: #{tpu_custom_call.1} parent=1 // pred_check_branch
      %220 = sbr.rel (0) target = $region33
    $region32: #{tpu_custom_call.1} parent=1 // pred_region
      %s222 = ssub.s32 16, 16
      %223 = vsyncadd [#allocation4], %s222
      %s225 = sshll.u32 [#allocation3], 4
      %s226 = int_to_ptr.vmem [resolvable:$true] %s225
      %228 = dma.vmem_to_hbm [thread:$0]  %s226, 16, %s7, [#allocation4]
    $region33: #{tpu_custom_call.1} parent=1 // pred_fallthru
      _
    // Predicated region
    $region34: #{tpu_custom_call.1} parent=1 // pred_check
      _
    $region35: #{tpu_custom_call.1} parent=1 // pred_check_branch
      %230 = sbr.rel (0) target = $region37
    $region36: #{tpu_custom_call.1} parent=1 // pred_region
      %231 = dma.done [#allocation4], 16
    $region37: #{tpu_custom_call.1} parent=1 // pred_fallthru
      _
    %232 = vsyncpa [#allocation4], 1

</llo_original>
